<compile_context>
chip_gen: v7x
topology: tpu7x:2x2x1
jax: 0.10.0
libtpu: 0.0.40
codegen_flags: <defaults>
</compile_context>

<pallas_src>
import math
import functools

import jax
import jax.numpy as jnp
from jax import lax
from jax.experimental import pallas as pl
from jax.experimental.pallas import tpu as pltpu

# bf16 operands feed the v5e/v6e/v7x MXU fast path; accumulation stays fp32.
# Set to jnp.float32 for closer bit-parity with the PyTorch fp32 forward.
MXU_INPUT_DTYPE = jnp.bfloat16


# --------------------------------------------------------------------------- #
# Small helpers
# --------------------------------------------------------------------------- #
def _pick_tile(dim, preferred, align):
    """Largest tile <= preferred that divides dim and is a multiple of align.

    Falls back to the full dimension (always legal for BlockSpec) if no aligned
    divisor exists.  TODO(synk): replace fallback with a masked/padded tail.
    """
    if dim % preferred == 0:
        return preferred
    t = min(preferred, (dim // align) * align)
    while t >= align:
        if dim % t == 0:
            return t
        t -= align
    return dim


def _padded_bytes(shape, dtype):
    """VMEM footprint of one buffer with (8, 128) last-two-dim padding."""
    s = list(shape)
    s[-1] = -(-s[-1] // 128) * 128
    if len(s) >= 2:
        s[-2] = -(-s[-2] // 8) * 8
    n = 1
    for d in s:
        n *= d
    return n * jnp.dtype(dtype).itemsize


def _vmem_limit(est_bytes):
    """Scoped VMEM limit: 2x headroom, floored at 32 MiB, capped at 64 MiB (v7x)."""
    return int(max(32 * 1024 * 1024, min(2 * est_bytes, 64 * 1024 * 1024)))


# --------------------------------------------------------------------------- #
# Linear (y = x @ W^T + b) kernels — W pre-transposed on the host to (D_in, D_out)
# --------------------------------------------------------------------------- #
def linear_kernel_out_acc(x_ref, w_ref, b_ref, o_ref):
    """f32 output: accumulate directly into the resident output block (no scratch)."""
    k = pl.program_id(2)

    @pl.when(k == 0)
    def _():
        o_ref[...] = jnp.broadcast_to(b_ref[...], o_ref.shape)

    o_ref[...] += jnp.dot(x_ref[...].astype(MXU_INPUT_DTYPE),
                          w_ref[...].astype(MXU_INPUT_DTYPE),
                          preferred_element_type=jnp.float32)


def linear_kernel_scratch_acc(x_ref, w_ref, b_ref, o_ref, acc_ref):
    """bf16 (or other non-f32) output: f32 VMEM accumulator, cast on finalize."""
    k = pl.program_id(2)

    @pl.when(k == 0)
    def _():
        acc_ref[...] = jnp.broadcast_to(b_ref[...].astype(jnp.float32),
                                        acc_ref.shape)

    acc_ref[...] += jnp.dot(x_ref[...].astype(MXU_INPUT_DTYPE),
                            w_ref[...].astype(MXU_INPUT_DTYPE),
                            preferred_element_type=jnp.float32)

    @pl.when(k == pl.num_programs(2) - 1)
    def _():
        o_ref[...] = acc_ref[...].astype(o_ref.dtype)


def _linear(x2d, w_t, b2d, *, out_dtype=jnp.float32, tm=512, tn=512, tk=512):
    """x2d: (M, K), w_t: (K, N) pre-transposed weight, b2d: (1, N) -> (M, N)."""
    M, K = x2d.shape
    N = w_t.shape[1]
    tm = _pick_tile(M, tm, 8)     # sublane dim
    tn = _pick_tile(N, tn, 128)   # lane dim of W / out
    tk = _pick_tile(K, tk, 128)   # lane dim of x, sublane dim of W
    grid = (M // tm, N // tn, K // tk)

    use_scratch = jnp.dtype(out_dtype) != jnp.dtype(jnp.float32)
    kernel = linear_kernel_scratch_acc if use_scratch else linear_kernel_out_acc
    scratch = [pltpu.VMEM((tm, tn), jnp.float32)] if use_scratch else []

    est = 2 * (_padded_bytes((tm, tk), x2d.dtype)
               + _padded_bytes((tk, tn), w_t.dtype)
               + _padded_bytes((1, tn), b2d.dtype)
               + _padded_bytes((tm, tn), out_dtype))
    if use_scratch:
        est += _padded_bytes((tm, tn), jnp.float32)

    return pl.pallas_call(
        kernel,
        out_shape=jax.ShapeDtypeStruct((M, N), out_dtype),
        grid_spec=pltpu.PrefetchScalarGridSpec(
            num_scalar_prefetch=0,
            grid=grid,
            in_specs=[
                pl.BlockSpec((tm, tk), lambda i, j, k: (i, k)),
                pl.BlockSpec((tk, tn), lambda i, j, k: (k, j)),
                pl.BlockSpec((1, tn), lambda i, j, k: (0, j)),
            ],
            out_specs=pl.BlockSpec((tm, tn), lambda i, j, k: (i, j)),
            scratch_shapes=scratch,
        ),
        compiler_params=pltpu.CompilerParams(
            dimension_semantics=("parallel", "parallel", "arbitrary"),
            vmem_limit_bytes=_vmem_limit(est)),
    )(x2d, w_t, b2d)


# --------------------------------------------------------------------------- #
# Flash-attention kernel (heads packed head-major in the last dim, D = H * d_k)
# --------------------------------------------------------------------------- #
def flash_attn_kernel(*refs, heads, d_k, masked):
    if masked:
        (q_ref, k_ref, v_ref, mask_ref, o_ref,
         qh_sc, kh_sc, vh_sc, m_sc, l_sc, acc_sc, bias_sc) = refs
    else:
        (q_ref, k_ref, v_ref, o_ref,
         qh_sc, kh_sc, vh_sc, m_sc, l_sc, acc_sc) = refs

    kv = pl.program_id(2)

    @pl.when(kv == 0)
    def _():
        m_sc[...] = jnp.full(m_sc.shape, -jnp.inf, jnp.float32)
        l_sc[...] = jnp.zeros(l_sc.shape, jnp.float32)
        acc_sc[...] = jnp.zeros(acc_sc.shape, jnp.float32)
        # Per-head Q slices (Q is pre-scaled by 1/sqrt(d_k) in the projection):
        # relayout copy ONCE per q tile, reused across every kv step.
        for h in range(heads):
            qh_sc[h] = q_ref[0, :, h * d_k:(h + 1) * d_k].astype(MXU_INPUT_DTYPE)

    # Stage per-head K/V slices for this kv step.  Static loop with tiny live
    # ranges; keeps all narrow lane slicing out of the MXU compute loop below.
    for h in range(heads):
        kh_sc[h] = k_ref[0, :, h * d_k:(h + 1) * d_k].astype(MXU_INPUT_DTYPE)
        vh_sc[h] = v_ref[0, :, h * d_k:(h + 1) * d_k].astype(MXU_INPUT_DTYPE)

    if masked:
        # Head-invariant additive bias, computed once per (q, kv) tile.
        # Module semantics: positions where mask == 1 get -1e9.
        bias_sc[...] = jnp.where(mask_ref[0] == 1,
                                 jnp.float32(-1e9), jnp.float32(0.0))

    def head_body(h, carry):
        q_h = qh_sc[h]                                 # (tq, d_k) MXU dtype
        k_h = kh_sc[h]                                 # (tk, d_k)
        v_h = vh_sc[h]                                 # (tk, d_k)
        # scores = q_h @ k_h^T as a contraction (no materialized transpose)
        s = lax.dot_general(q_h, k_h, (((1,), (1,)), ((), ())),
                            preferred_element_type=jnp.float32)   # (tq, tk) f32
        if masked:
            s = s + bias_sc[...]
        m_prev = m_sc[h]                                            # (tq, 1)
        m_new = jnp.maximum(m_prev, jnp.max(s, axis=-1, keepdims=True))
        alpha = jnp.exp(m_prev - m_new)
        p = jnp.exp(s - m_new)                                      # (tq, tk) f32
        l_sc[h] = alpha * l_sc[h] + jnp.sum(p, axis=-1, keepdims=True)
        acc_sc[h] = alpha * acc_sc[h] + jnp.dot(
            p.astype(MXU_INPUT_DTYPE), v_h, preferred_element_type=jnp.float32)
        m_sc[h] = m_new
        return carry

    # fori_loop (grouped unroll) bounds vreg live ranges vs. a fully unrolled loop.
    lax.fori_loop(0, heads, head_body, 0, unroll=2)

    @pl.when(kv == pl.num_programs(2) - 1)
    def _():
        # Normalize (EUP approx reciprocal) and do ONE lane-dense (tq, D) store.
        outs = [acc_sc[h] * pl.reciprocal(l_sc[h], approx=True)
                for h in range(heads)]
        o_ref[0] = jnp.concatenate(outs, axis=-1).astype(o_ref.dtype)


def _flash_attention(Q, K, V, mask, heads, *, tq=256, tk=256):
    """Q/K/V: (B, S, D) with heads packed head-major in D. Returns (B, S, D) f32."""
    B, S, D = Q.shape
    d_k = D // heads
    tq = _pick_tile(S, tq, 8)     # sublane dim of q/out/mask tiles
    tk = _pick_tile(S, tk, 128)   # lane dim of the mask tile / score matrix
    grid = (B, S // tq, S // tk)
    masked = mask is not None

    q_spec = pl.BlockSpec((1, tq, D), lambda b, qi, ki: (b, qi, 0))
    kv_spec = pl.BlockSpec((1, tk, D), lambda b, qi, ki: (b, ki, 0))
    o_spec = pl.BlockSpec((1, tq, D), lambda b, qi, ki: (b, qi, 0))

    in_specs = [q_spec, kv_spec, kv_spec]
    args = [Q, K, V]
    if masked:
        in_specs.append(pl.BlockSpec((1, tq, tk), lambda b, qi, ki: (b, qi, ki)))
        args.append(mask.astype(jnp.int8))   # int8 stream

    scratch = [
        pltpu.VMEM((heads, tq, d_k), MXU_INPUT_DTYPE),  # per-head Q slices
        pltpu.VMEM((heads, tk, d_k), MXU_INPUT_DTYPE),  # per-head K slices
        pltpu.VMEM((heads, tk, d_k), MXU_INPUT_DTYPE),  # per-head V slices
        pltpu.VMEM((heads, tq, 1), jnp.float32),        # running max   m_i
        pltpu.VMEM((heads, tq, 1), jnp.float32),        # running denom l_i
        pltpu.VMEM((heads, tq, d_k), jnp.float32),      # running numerator
    ]
    if masked:
        scratch.append(pltpu.VMEM((tq, tk), jnp.float32))  # additive mask bias

    est = 2 * (_padded_bytes((1, tq, D), Q.dtype)
               + 2 * _padded_bytes((1, tk, D), K.dtype)
               + _padded_bytes((1, tq, D), jnp.float32))
    if masked:
        est += 2 * _padded_bytes((1, tq, tk), jnp.int8)
        est += _padded_bytes((tq, tk), jnp.float32)
    est += (_padded_bytes((heads, tq, d_k), MXU_INPUT_DTYPE)
            + 2 * _padded_bytes((heads, tk, d_k), MXU_INPUT_DTYPE)
            + 2 * _padded_bytes((heads, tq, 1), jnp.float32)
            + _padded_bytes((heads, tq, d_k), jnp.float32))

    kernel = functools.partial(flash_attn_kernel, heads=heads, d_k=d_k,
                               masked=masked)

    return pl.pallas_call(
        kernel,
        out_shape=jax.ShapeDtypeStruct((B, S, D), jnp.float32),
        grid_spec=pltpu.PrefetchScalarGridSpec(
            num_scalar_prefetch=0,
            grid=grid,
            in_specs=in_specs,
            out_specs=o_spec,
            scratch_shapes=scratch,
        ),
        compiler_params=pltpu.CompilerParams(
            dimension_semantics=("parallel", "parallel", "arbitrary"),
            vmem_limit_bytes=_vmem_limit(est)),
    )(*args)


# --------------------------------------------------------------------------- #
# Module forward
# --------------------------------------------------------------------------- #
def multi_head_attention(q, k, v, params, heads, mask=None):
    """Forward pass matching MultiHeadAttention.forward (eval mode)."""
    B, S, D = q.shape
    d_k = D // heads
    scale = 1.0 / math.sqrt(d_k)

    # Host-side weight prep (once): transpose to (D_in, D_out), fold 1/sqrt(d_k)
    # into the Q projection (weights AND bias), cast weights to the MXU dtype.
    wq_t = (params["wq"] * scale).T.astype(MXU_INPUT_DTYPE)
    bq = (params["bq"] * scale).astype(jnp.float32)
    wk_t = params["wk"].T.astype(MXU_INPUT_DTYPE)
    wv_t = params["wv"].T.astype(MXU_INPUT_DTYPE)
    wo_t = params["wo"].T.astype(MXU_INPUT_DTYPE)

    def proj(x2d, w_t, b, out_dtype):
        return _linear(x2d, w_t, b.reshape(1, -1), out_dtype=out_dtype)

    x_q = q.reshape(B * S, D)
    if q is k and k is v:
        # Fused QKV projection: read the activation from HBM once, one launch.
        w_qkv_t = jnp.concatenate([wq_t, wk_t, wv_t], axis=1)        # (D, 3D)
        b_qkv = jnp.concatenate([bq, params["bk"], params["bv"]])
        qkv = proj(x_q, w_qkv_t, b_qkv, MXU_INPUT_DTYPE).reshape(B, S, 3 * D)
        Q, K, V = qkv[..., :D], qkv[..., D:2 * D], qkv[..., 2 * D:]
    else:
        Q = proj(x_q, wq_t, bq, MXU_INPUT_DTYPE).reshape(B, S, D)
        K = proj(k.reshape(B * S, D), wk_t, params["bk"],
                 MXU_INPUT_DTYPE).reshape(B, S, D)
        V = proj(v.reshape(B * S, D), wv_t, params["bv"],
                 MXU_INPUT_DTYPE).reshape(B, S, D)

    # Flash-style attention; output is already "concat heads" (B, S, D) f32.
    attn = _flash_attention(Q, K, V, mask, heads)

    # Output projection (f32 result).
    out = proj(attn.reshape(B * S, D), wo_t, params["bo"], jnp.float32)
    return out.reshape(B, S, D)


# --------------------------------------------------------------------------- #
# Pure-JAX reference (for a loose numerical check) & parameter init
# --------------------------------------------------------------------------- #
def reference_mha(q, k, v, params, heads, mask=None):
    B, S, D = q.shape
    d_k = D // heads

    def lin(x, w, b):
        return x @ w.T + b

    def split(x):
        return x.reshape(B, S, heads, d_k).transpose(0, 2, 1, 3)

    Q = split(lin(q, params["wq"], params["bq"]))
    K = split(lin(k, params["wk"], params["bk"]))
    V = split(lin(v, params["wv"], params["bv"]))
    s = jnp.einsum("bhqd,bhkd->bhqk", Q, K) / math.sqrt(d_k)
    if mask is not None:
        s = jnp.where(mask[:, None, :, :] == 1, jnp.float32(-1e9), s)
    p = jax.nn.softmax(s, axis=-1)
    o = jnp.einsum("bhqk,bhkd->bhqd", p, V)
    o = o.transpose(0, 2, 1, 3).reshape(B, S, D)
    return lin(o, params["wo"], params["bo"])


def init_params(key, d_model):
    """PyTorch nn.Linear-style init: U(-1/sqrt(in), 1/sqrt(in))."""
    bound = 1.0 / math.sqrt(d_model)
    names = ["wq", "bq", "wk", "bk", "wv", "bv", "wo", "bo"]
    keys = jax.random.split(key, len(names))
    params = {}
    for name, kk in zip(names, keys):
        if name.startswith("w"):
            params[name] = jax.random.uniform(
                kk, (d_model, d_model), jnp.float32, -bound, bound)
        else:
            params[name] = jax.random.uniform(
                kk, (d_model,), jnp.float32, -bound, bound)
    return params


# --------------------------------------------------------------------------- #
# Main
# --------------------------------------------------------------------------- #
if __name__ == "__main__":
    B, S, D, H = 2, 8, 32, 4

    root = jax.random.PRNGKey(0)
    k_p, k_q, k_k, k_v, k_m = jax.random.split(root, 5)

    params = init_params(k_p, D)
    q = jax.random.normal(k_q, (B, S, D), jnp.float32)
    k = jax.random.normal(k_k, (B, S, D), jnp.float32)
    v = jax.random.normal(k_v, (B, S, D), jnp.float32)
    mask = (jax.random.uniform(k_m, (B, S, S)) > 0.7).astype(jnp.int32)

    # No-mask path.
    out = jax.block_until_ready(multi_head_attention(q, k, v, params, heads=H))
    assert out.shape == (B, S, D), out.shape
    assert bool(jnp.all(jnp.isfinite(out)))
    ref = reference_mha(q, k, v, params, H, None)
    assert float(jnp.max(jnp.abs(out - ref))) < 1e-1   # loose: bf16 MXU operands

    # Masked path (module semantics: positions where mask == 1 get -1e9).
    out_m = jax.block_until_ready(
        multi_head_attention(q, k, v, params, heads=H, mask=mask))
    assert out_m.shape == (B, S, D), out_m.shape
    assert bool(jnp.all(jnp.isfinite(out_m)))
    ref_m = reference_mha(q, k, v, params, H, mask)
    assert float(jnp.max(jnp.abs(out_m - ref_m))) < 1e-1

    # Self-attention path exercises the fused QKV projection.
    out_s = jax.block_until_ready(
        multi_head_attention(q, q, q, params, heads=H, mask=mask))
    assert out_s.shape == (B, S, D), out_s.shape
    assert bool(jnp.all(jnp.isfinite(out_s)))
    ref_s = reference_mha(q, q, q, params, H, mask)
    assert float(jnp.max(jnp.abs(out_s - ref_s))) < 1e-1

    print("KERNEL_OK")
</pallas_src>

<mosaic_0001>
module attributes {stable_mosaic.version = 11 : i64} {
  func.func @linear_kernel_scratch_acc(%arg0: i32, %arg1: i32, %arg2: i32, %arg3: memref<16x32xf32, #tpu.memory_space<vmem>>, %arg4: memref<32x32xbf16, #tpu.memory_space<vmem>>, %arg5: memref<1x32xf32, #tpu.memory_space<vmem>>, %arg6: memref<16x32xbf16, #tpu.memory_space<vmem>>, %arg7: memref<16x32xf32, #tpu.memory_space<vmem>>) attributes {dimension_semantics = [#tpu.dimension_semantics<parallel>, #tpu.dimension_semantics<parallel>, #tpu.dimension_semantics<arbitrary>], iteration_bounds = array<i64: 1, 1, 1>, scalar_prefetch = 0 : i64, scratch_operands = 1 : i64, tpu.core_type = #tpu.core_type<tc>, window_params = [{transform_indices = @transform_0, window_bounds = array<i64: 16, 32>}, {transform_indices = @transform_1, window_bounds = array<i64: 32, 32>}, {transform_indices = @transform_2, window_bounds = array<i64: 1, 32>}, {transform_indices = @transform_3, window_bounds = array<i64: 16, 32>}]} {
    %c0_i32 = arith.constant 0 : i32
    %0 = arith.cmpi eq, %arg2, %c0_i32 : i32
    %1 = arith.extui %0 : i1 to i32
    %c0_i32_0 = arith.constant 0 : i32
    %2 = arith.cmpi ne, %1, %c0_i32_0 : i32
    scf.if %2 {
      %c0_10 = arith.constant 0 : index
      %c0_11 = arith.constant 0 : index
      %13 = vector.load %arg5[%c0_10, %c0_11] : memref<1x32xf32, #tpu.memory_space<vmem>>, vector<1x32xf32>
      %14 = vector.shape_cast %13 : vector<1x32xf32> to vector<1x32xf32>
      %15 = vector.broadcast %14 : vector<1x32xf32> to vector<16x32xf32>
      %c0_12 = arith.constant 0 : index
      %c0_13 = arith.constant 0 : index
      %16 = vector.load %arg7[%c0_12, %c0_13] : memref<16x32xf32, #tpu.memory_space<vmem>>, vector<16x32xf32>
      tpu.vector_store %arg7[%c0_12, %c0_13], %15 {strides = array<i32>} : memref<16x32xf32, #tpu.memory_space<vmem>>, vector<16x32xf32>,
    } else {
    }
    %c0 = arith.constant 0 : index
    %c0_1 = arith.constant 0 : index
    %3 = vector.load %arg7[%c0, %c0_1] : memref<16x32xf32, #tpu.memory_space<vmem>>, vector<16x32xf32>
    %c0_2 = arith.constant 0 : index
    %c0_3 = arith.constant 0 : index
    %4 = vector.load %arg3[%c0_2, %c0_3] : memref<16x32xf32, #tpu.memory_space<vmem>>, vector<16x32xf32>
    %5 = arith.truncf %4 : vector<16x32xf32> to vector<16x32xbf16>
    %c0_4 = arith.constant 0 : index
    %c0_5 = arith.constant 0 : index
    %6 = vector.load %arg4[%c0_4, %c0_5] : memref<32x32xbf16, #tpu.memory_space<vmem>>, vector<32x32xbf16>
    %cst = arith.constant dense<0.000000e+00> : vector<16x32xf32>
    %7 = tpu.matmul %5, %6, %cst {dimension_numbers = #tpu.dot_dimension_numbers<[1], [0], [0], [1], [0, 0, 1, 1], [], []>} : vector<16x32xbf16>, vector<32x32xbf16>, vector<16x32xf32> -> vector<16x32xf32>
    %8 = arith.addf %3, %7 : vector<16x32xf32>
    %c0_6 = arith.constant 0 : index
    %c0_7 = arith.constant 0 : index
    %9 = vector.load %arg7[%c0_6, %c0_7] : memref<16x32xf32, #tpu.memory_space<vmem>>, vector<16x32xf32>
    tpu.vector_store %arg7[%c0_6, %c0_7], %8 {strides = array<i32>} : memref<16x32xf32, #tpu.memory_space<vmem>>, vector<16x32xf32>,
    %c0_i32_8 = arith.constant 0 : i32
    %10 = arith.cmpi eq, %arg2, %c0_i32_8 : i32
    %11 = arith.extui %10 : i1 to i32
    %c0_i32_9 = arith.constant 0 : i32
    %12 = arith.cmpi ne, %11, %c0_i32_9 : i32
    scf.if %12 {
      %c0_10 = arith.constant 0 : index
      %c0_11 = arith.constant 0 : index
      %13 = vector.load %arg7[%c0_10, %c0_11] : memref<16x32xf32, #tpu.memory_space<vmem>>, vector<16x32xf32>
      %14 = arith.truncf %13 : vector<16x32xf32> to vector<16x32xbf16>
      %c0_12 = arith.constant 0 : index
      %c0_13 = arith.constant 0 : index
      %15 = vector.load %arg6[%c0_12, %c0_13] : memref<16x32xbf16, #tpu.memory_space<vmem>>, vector<16x32xbf16>
      tpu.vector_store %arg6[%c0_12, %c0_13], %14 {strides = array<i32>} : memref<16x32xbf16, #tpu.memory_space<vmem>>, vector<16x32xbf16>,
    } else {
    }
    return
  }
  func.func @transform_0(%arg0: i32, %arg1: i32, %arg2: i32) -> (i32, i32) {
    %c0_i32 = arith.constant 0 : i32
    return %arg0, %arg2 : i32, i32
  }
  func.func @transform_1(%arg0: i32, %arg1: i32, %arg2: i32) -> (i32, i32) {
    %c0_i32 = arith.constant 0 : i32
    return %arg2, %arg1 : i32, i32
  }
  func.func @transform_2(%arg0: i32, %arg1: i32, %arg2: i32) -> (i32, i32) {
    %c0_i32 = arith.constant 0 : i32
    %c0_i32_0 = arith.constant 0 : i32
    return %c0_i32, %arg1 : i32, i32
  }
  func.func @transform_3(%arg0: i32, %arg1: i32, %arg2: i32) -> (i32, i32) {
    %c0_i32 = arith.constant 0 : i32
    return %arg0, %arg1 : i32, i32
  }
}

</mosaic_0001>

<llo_original>
// kernel: tpu_custom_call.1
$region0: #{tpu_custom_call.1}
  #allocation0 [shape = 'u32[]', space=smem, size = 0x4, offset = 0x4, fixed_abs, tag = 'smem constant byte address 0x4 - core index']
  #allocation1 [shape = 'u32[144,128]{1,0:T(1,128)}', space=vmem, size = 0x12000, scoped, tag = 'internal scratch']
  #allocation2 [shape = 'f32[16,32]{1,0:T(8,128)}', space=vmem, size = 0x2000, scoped, tag = 'scratch operand']
  %s0 = inlined_call_operand.hbm [shape: f32[16,32], index: 0, kind: input, shape index: {}]
  %s1 = inlined_call_operand.hbm [shape: bf16[32,32], index: 1, kind: input, shape index: {}]
  %s2 = inlined_call_operand.vmem [shape: f32[1,32], index: 2, kind: input, shape index: {}]
  %s3 = inlined_call_operand.hbm [shape: bf16[16,32], index: 3, kind: output, shape index: {}]
  %s4 = sld [smem:[#allocation0]]
  $region38: #{tpu_custom_call.1} parent=0
    _
  %s6 = ssub.s32 1, %s4
  %s7 = scalar_select 0, %s6, %s4
  $region1: #{tpu_custom_call.1} parent=0
    #allocation3 [shape = 'u8[8192]{0}', space=vmem, size = 0x2000, scoped, tag = 'input window, operand 0, single buffered']
    #allocation4 [shape = 's32[1]{0}', space=sflag, size = 0x4, scoped, tag = 'scoped memory for tpu_custom_call.1']
    #allocation5 [shape = 's32[1]{0}', space=sflag, size = 0x4, scoped, tag = 'scoped memory for tpu_custom_call.1']
    #allocation6 [shape = 'u8[8192]{0}', space=vmem, size = 0x2000, scoped, tag = 'input window, operand 1, single buffered']
    #allocation7 [shape = 's32[1]{0}', space=sflag, size = 0x4, scoped, tag = 'scoped memory for tpu_custom_call.1']
    #allocation8 [shape = 'u8[4096]{0}', space=vmem, size = 0x1000, scoped, tag = 'output window, operand 0, single buffered']
    %8 = vsyncpa [#allocation4], 0
    %9 = vsyncpa [#allocation7], 0
    %10 = vsyncpa [#allocation5], 0
    // Predicated region
    $region2: #{tpu_custom_call.1} parent=1 // pred_check
      _
    $region3: #{tpu_custom_call.1} parent=1 // pred_check_branch
      %12 = sbr.rel (0) target = $region5
    $region4: #{tpu_custom_call.1} parent=1 // pred_region
      %s14 = ssub.s32 256, 256
      %15 = vsyncadd [#allocation4], %s14
      %s16 = sshll.u32 [#allocation3], 4
      %s17 = int_to_ptr.vmem [resolvable:$true] %s16
      %22 = dma.hbm_to_vmem [thread:$0]  %s0, 256, %s17, [#allocation4], 128, 128, 8
    $region5: #{tpu_custom_call.1} parent=1 // pred_fallthru
      _
    // Predicated region
    $region6: #{tpu_custom_call.1} parent=1 // pred_check
      _
    $region7: #{tpu_custom_call.1} parent=1 // pred_check_branch
      %24 = sbr.rel (0) target = $region9
    $region8: #{tpu_custom_call.1} parent=1 // pred_region
      %s26 = ssub.s32 256, 256
      %27 = vsyncadd [#allocation7], %s26
      %s28 = sshll.u32 [#allocation6], 4
      %s29 = int_to_ptr.vmem [resolvable:$true] %s28
      %34 = dma.hbm_to_vmem [thread:$0]  %s1, 256, %s29, [#allocation7], 64, 64, 4
    $region9: #{tpu_custom_call.1} parent=1 // pred_fallthru
      _
    // Predicated region
    $region10: #{tpu_custom_call.1} parent=1 // pred_check
      _
    $region11: #{tpu_custom_call.1} parent=1 // pred_check_branch
      %36 = sbr.rel (0) target = $region13
    $region12: #{tpu_custom_call.1} parent=1 // pred_region
      _
    $region13: #{tpu_custom_call.1} parent=1 // pred_fallthru
      _
    // Predicated region
    $region14: #{tpu_custom_call.1} parent=1 // pred_check
      _
    $region15: #{tpu_custom_call.1} parent=1 // pred_check_branch
      %38 = sbr.rel (0) target = $region17
    $region16: #{tpu_custom_call.1} parent=1 // pred_region
      %39 = dma.done [#allocation4], 256
    $region17: #{tpu_custom_call.1} parent=1 // pred_fallthru
      _
    // Predicated region
    $region18: #{tpu_custom_call.1} parent=1 // pred_check
      _
    $region19: #{tpu_custom_call.1} parent=1 // pred_check_branch
      %41 = sbr.rel (0) target = $region21
    $region20: #{tpu_custom_call.1} parent=1 // pred_region
      %42 = dma.done [#allocation7], 256
    $region21: #{tpu_custom_call.1} parent=1 // pred_fallthru
      _
    %p44 = scmp.eq.s32.totalorder 0, 0
    // Predicated region
    $region22: #{tpu_custom_call.1} parent=1 // pred_check
      %p45 = pneg %p44
    $region23: #{tpu_custom_call.1} parent=1 // pred_check_branch
      %47 = sbr.rel (%p45) target = $region25
    $region24: #{tpu_custom_call.1} parent=1 // pred_region
      %v48 = vld [vmem:[%s2] sm:$0x1]
      %v50 = vlaneseq
      %v51 = vshrl.u32 %v50, 7
      %v52 = vsub.s32 0, %v51
      %v53 = vrot.slane %v48, %v52
      %vm55 = vcmask 261120
      %56 = vst.msk [vmem:[#allocation2] sm:$0xff] %vm55, %v53
      %57 = vst.msk [vmem:[#allocation2 + $0x8] sm:$0xff] %vm55, %v53
    $region25: #{tpu_custom_call.1} parent=1 // pred_fallthru
      _
    %v58 = vld [vmem:[#allocation2] sm:$0xff]
    %v59 = vld [vmem:[#allocation2 + $0x8] sm:$0xff]
    %v60 = vld [vmem:[#allocation3] sm:$0xff]
    %v61 = vld [vmem:[#allocation3 + $0x8] sm:$0xff]
    %v62 = vpack.c.bf16 %v61, %v60
    %v63 = vld [vmem:[#allocation6] sm:$0xf]
    %v64 = vld [vmem:[#allocation6 + $0x4] sm:$0xf]
    %v65 = vld [vmem:[#allocation6 + $0x8] sm:$0xf]
    %v66 = vld [vmem:[#allocation6 + $0xc] sm:$0xf]
    %v71 = vunpack.c.l.b16 %v63
    %v72 = vunpack.c.l.b16 %v64
    %v73 = vunpack.c.l.b16 %v65
    %v74 = vunpack.c.l.b16 %v66
    %v75 = vpack.c.b16 %v72, %v71
    %v76 = vpack.c.b16 %v74, %v73
    %vm79 = vcmask 261120
    %v81 = vsel %vm79, %v62, 0
    %83 = vmatprep.subr.bf16.mxu0 0
    %84 = vmatpush1.bf16.msra.mxu0 %v75
    %85 = vmatprep.subr.bf16.mxu0 0
    %86 = vmatpush1.bf16.msra.mxu0 %v76
    %87 = vmatprep.subr.bf16.mxu0 0
    %88 = vmatpush1.bf16.msra.mxu0 0
    %89 = vmatprep.subr.bf16.mxu0 0
    %90 = vmatpush1.bf16.msra.mxu0 0
    %91 = vmatprep.subr.bf16.mxu0 0
    %92 = vmatpush1.bf16.msra.mxu0 0
    %93 = vmatprep.subr.bf16.mxu0 0
    %94 = vmatpush1.bf16.msra.mxu0 0
    %95 = vmatprep.subr.bf16.mxu0 0
    %96 = vmatpush1.bf16.msra.mxu0 0
    %97 = vmatprep.subr.bf16.mxu0 0
    %98 = vmatpush1.bf16.msra.mxu0 0
    %99 = vmatprep.subr.bf16.mxu0 0
    %100 = vmatpush1.bf16.msra.mxu0 0
    %101 = vmatprep.subr.bf16.mxu0 0
    %102 = vmatpush1.bf16.msra.mxu0 0
    %103 = vmatprep.subr.bf16.mxu0 0
    %104 = vmatpush1.bf16.msra.mxu0 0
    %105 = vmatprep.subr.bf16.mxu0 0
    %106 = vmatpush1.bf16.msra.mxu0 0
    %107 = vmatprep.subr.bf16.mxu0 0
    %108 = vmatpush1.bf16.msra.mxu0 0
    %109 = vmatprep.subr.bf16.mxu0 0
    %110 = vmatpush1.bf16.msra.mxu0 0
    %111 = vmatprep.subr.bf16.mxu0 0
    %112 = vmatpush1.bf16.msra.mxu0 0
    %113 = vmatprep.subr.bf16.mxu0 0
    %114 = vmatpush1.bf16.msra.mxu0 0
    %115 = vmatprep.mubr.bf16.mxu0 0
    %116 = vmatmul.mubr.bf16.gmra.mrb[0].mxu0 %v81
    %v117 = vpop.f32.mrb[0].mxu0
    %v118 = vadd.f32 0.0, %v117
    %v119 = vpop.f32.mrb[0].mxu0
    %v120 = vpop.f32.mrb[0].mxu0
    %v121 = vadd.f32 0.0, %v120
    %v122 = vpop.f32.mrb[0].mxu0
    %123 = vdwg.mxu0
    %v124 = vadd.f32 %v58, %v118
    %v125 = vadd.f32 %v59, %v121
    %126 = vst.msk [vmem:[#allocation2] sm:$0xff] %vm79, %v124
    %127 = vst.msk [vmem:[#allocation2 + $0x8] sm:$0xff] %vm79, %v125
    // Predicated region
    $region26: #{tpu_custom_call.1} parent=1 // pred_check
      %p128 = pneg %p44
    $region27: #{tpu_custom_call.1} parent=1 // pred_check_branch
      %130 = sbr.rel (%p128) target = $region29
    $region28: #{tpu_custom_call.1} parent=1 // pred_region
      %v131 = vld [vmem:[#allocation2] sm:$0xff]
      %v132 = vld [vmem:[#allocation2 + $0x8] sm:$0xff]
      %v133 = vpack.c.bf16 %v132, %v131
      %v135 = vunpack.c.l.b16 %v133
      %v136 = vunpack.c.h.b16 %v133
      %v137 = vpack.c.b16 %v135, %v135
      %v138 = vpack.c.b16 %v136, %v136
      %vm141 = vcmask 257024
      %142 = vst.msk [vmem:[#allocation8] sm:$0xf] %vm141, %v137
      %143 = vst.msk [vmem:[#allocation8 + $0x4] sm:$0xf] %vm141, %v138
    $region29: #{tpu_custom_call.1} parent=1 // pred_fallthru
      _
    // Predicated region
    $region30: #{tpu_custom_call.1} parent=1 // pred_check
      _
    $region31: #{tpu_custom_call.1} parent=1 // pred_check_branch
      %145 = sbr.rel (0) target = $region33
    $region32: #{tpu_custom_call.1} parent=1 // pred_region
      %s147 = ssub.s32 128, 128
      %148 = vsyncadd [#allocation5], %s147
      %s149 = sshll.u32 [#allocation8], 4
      %s150 = int_to_ptr.vmem [resolvable:$true] %s149
      %155 = dma.vmem_to_hbm [thread:$0]  %s150, 128, %s3, [#allocation5], 64, 64, 4
    $region33: #{tpu_custom_call.1} parent=1 // pred_fallthru
      _
    // Predicated region
    $region34: #{tpu_custom_call.1} parent=1 // pred_check
      _
    $region35: #{tpu_custom_call.1} parent=1 // pred_check_branch
      %157 = sbr.rel (0) target = $region37
    $region36: #{tpu_custom_call.1} parent=1 // pred_region
      %158 = dma.done [#allocation5], 128
    $region37: #{tpu_custom_call.1} parent=1 // pred_fallthru
      _
    %159 = vsyncpa [#allocation4], 1
    %160 = vsyncpa [#allocation7], 1
    %161 = vsyncpa [#allocation5], 1

</llo_original>
